<compile_context>
chip_gen: v7x
topology: tpu7x:2x2x1
jax: 0.10.0
libtpu: 0.0.40
codegen_flags: <defaults>
</compile_context>

<pallas_src>
import jax
import jax.numpy as jnp
from jax.experimental import pallas as pl
from jax.experimental.pallas import tpu as pltpu

NODE_IN = 6
EMBED_DIM = 128          # ModelParams().dihedral_embed_dim (synthetic choice)
EPS = 1e-6


def dihedral_kernel(x_ref, w_ref, p_ref, ones_ref, o_ref):
    # x_ref:    (TL, 6)   row tile of one batch's (L, 6) dihedral features
    # w_ref:    (6, D)    mean-centered weight (W - mean over D)
    # p_ref:    (3, D)    rows: [b - mean(b), gain, bias]
    # ones_ref: (D, 8)    ones matrix used to do the row-sum on the MXU
    # o_ref:    (TL, D)
    x = x_ref[...]
    w = w_ref[...]
    b_c = p_ref[0:1, :]       # (1, D) mean-centered linear bias
    gain = p_ref[1:2, :]      # (1, D)
    bias = p_ref[2:3, :]      # (1, D)

    # Because W and b are mean-centered over D, this IS (v - mean(v)) directly.
    diff = jnp.dot(x, w, preferred_element_type=jnp.float32) + b_c      # (TL, D)

    # Row-sum of squares on the idle MXU instead of a 128-lane XLU reduce.
    d2 = diff * diff
    ss = jnp.dot(d2, ones_ref[...], preferred_element_type=jnp.float32)[:, 0:1]  # (TL, 1)

    d = diff.shape[-1]
    var = ss * (1.0 / (d - 1))                 # torch.var default: unbiased (D-1)
    sigma = jnp.sqrt(var + EPS)
    inv = pl.reciprocal(sigma + EPS, approx=False)   # keep exact double-eps semantics

    o_ref[...] = (gain * (diff * inv) + bias).astype(o_ref.dtype)


def dihedral_features(x, w, b, gain, bias, *, tl=4096, out_dtype=jnp.float32):
    """x: (B, L, 6) float32, w: (6, D), b/gain/bias: (D,) -> (B, L, D)."""
    B, L, K = x.shape
    assert K == NODE_IN
    D = w.shape[1]

    # Fold the mean subtraction of the Normalize into the Linear parameters:
    # mean_D(x@W + b) = x @ mean_D(W) + mean(b), so centering W/b over D gives v - mu.
    w_c = w - jnp.mean(w, axis=1, keepdims=True)
    b_c = b - jnp.mean(b)
    params = jnp.stack([b_c, gain, bias], axis=0)          # (3, D)
    ones_col = jnp.ones((D, 8), jnp.float32)               # MXU row-sum helper

    # --- tile selection (L axis; must be a multiple of 8) ---
    def _up8(n):
        return ((n + 7) // 8) * 8

    tl = max(8, (int(tl) // 8) * 8)
    l_pad8 = _up8(L)
    tl_eff = min(tl, l_pad8)
    # v7x megacore: with a single batch, make sure the L axis still yields >= 2 blocks.
    if B == 1 and l_pad8 > 8 and tl_eff >= l_pad8:
        tl_eff = max(8, _up8(pl.cdiv(L, 2)))

    # --- VMEM budget: the (tl, 6) input tile is lane-padded to 128 in VMEM and is as
    # large as the output tile; keep the double-buffered working set under ~44 MiB so
    # the same config fits v7x's 64 MiB/TC VMEM, and raise the scoped limit for v5e.
    lane = 128
    d_pad = ((D + lane - 1) // lane) * lane
    bytes_per_row = (lane + d_pad) * 4
    max_rows = (44 << 20) // (2 * bytes_per_row)
    tl_eff = min(tl_eff, max(8, (max_rows // 8) * 8))
    vmem_limit = min(max(2 * tl_eff * bytes_per_row + (4 << 20), 32 << 20), 48 << 20)

    grid = (B, pl.cdiv(L, tl_eff))

    out = pl.pallas_call(
        dihedral_kernel,
        out_shape=jax.ShapeDtypeStruct((B, L, D), out_dtype),
        grid_spec=pltpu.PrefetchScalarGridSpec(
            num_scalar_prefetch=0,
            grid=grid,
            in_specs=[
                # x row tile of one batch element; ragged last block is edge-masked.
                pl.BlockSpec((pl.Squeezed(), tl_eff, K), lambda bi, li: (bi, li, 0)),
                pl.BlockSpec((K, D), lambda bi, li: (0, 0)),   # centered weight (resident)
                pl.BlockSpec((3, D), lambda bi, li: (0, 0)),   # packed b'/gain/bias
                pl.BlockSpec((D, 8), lambda bi, li: (0, 0)),   # ones for MXU row-sum
            ],
            out_specs=pl.BlockSpec((pl.Squeezed(), tl_eff, D),
                                   lambda bi, li: (bi, li, 0)),
        ),
        compiler_params=pltpu.CompilerParams(
            dimension_semantics=("parallel", "parallel"),
            vmem_limit_bytes=vmem_limit),
    )(x, w_c, params, ones_col)

    return out


def reference(x, w, b, gain, bias):
    v = jnp.einsum("bld,de->ble", x, w) + b
    mu = jnp.mean(v, axis=-1, keepdims=True)
    var = jnp.sum((v - mu) ** 2, axis=-1, keepdims=True) / (v.shape[-1] - 1)
    sigma = jnp.sqrt(var + EPS)
    return gain * (v - mu) / (sigma + EPS) + bias


if __name__ == "__main__":
    key = jax.random.PRNGKey(0)
    kx, kw, kb, kx2, kx3 = jax.random.split(key, 5)

    # Deterministic synthetic parameters (nn.Linear(6, D): weight (D,6), bias (D));
    # stored here transposed as (6, D) for the x @ W layout.
    bound = 1.0 / (NODE_IN ** 0.5)
    w = jax.random.uniform(kw, (NODE_IN, EMBED_DIM), jnp.float32, -bound, bound)
    b = jax.random.uniform(kb, (EMBED_DIM,), jnp.float32, -bound, bound)
    gain = jnp.ones((EMBED_DIM,), jnp.float32)   # Normalize.gain init
    bias = jnp.zeros((EMBED_DIM,), jnp.float32)  # Normalize.bias init

    # Small primary test (single exact block per batch element).
    B, L = 2, 16
    x = jax.random.normal(kx, (B, L, NODE_IN), dtype=jnp.float32)
    out = jax.block_until_ready(dihedral_features(x, w, b, gain, bias))
    ref = reference(x, w, b, gain, bias)
    assert out.shape == (B, L, EMBED_DIM)
    assert jnp.allclose(out, ref, atol=1e-5, rtol=1e-5), float(jnp.max(jnp.abs(out - ref)))

    # Multi-block + ragged-last-block path (L = 300, tl = 128 -> 3 blocks, last ragged).
    B2, L2 = 2, 300
    x_b = jax.random.normal(kx2, (B2, L2, NODE_IN), dtype=jnp.float32)
    out_b = jax.block_until_ready(dihedral_features(x_b, w, b, gain, bias, tl=128))
    ref_b = reference(x_b, w, b, gain, bias)
    assert out_b.shape == (B2, L2, EMBED_DIM)
    assert jnp.allclose(out_b, ref_b, atol=1e-5, rtol=1e-5), float(jnp.max(jnp.abs(out_b - ref_b)))

    # L % 8 != 0 and B == 1 (exercises edge masking and the megacore tile clamp).
    B3, L3 = 1, 13
    x_c = jax.random.normal(kx3, (B3, L3, NODE_IN), dtype=jnp.float32)
    out_c = jax.block_until_ready(dihedral_features(x_c, w, b, gain, bias))
    ref_c = reference(x_c, w, b, gain, bias)
    assert out_c.shape == (B3, L3, EMBED_DIM)
    assert jnp.allclose(out_c, ref_c, atol=1e-5, rtol=1e-5), float(jnp.max(jnp.abs(out_c - ref_c)))

    print("KERNEL_OK")
</pallas_src>

<mosaic_0001>
module attributes {stable_mosaic.version = 11 : i64} {
  func.func @dihedral_kernel(%arg0: i32, %arg1: i32, %arg2: memref<1x16x6xf32, #tpu.memory_space<vmem>>, %arg3: memref<6x128xf32, #tpu.memory_space<vmem>>, %arg4: memref<3x128xf32, #tpu.memory_space<vmem>>, %arg5: memref<128x8xf32, #tpu.memory_space<vmem>>, %arg6: memref<1x16x128xf32, #tpu.memory_space<vmem>>) attributes {dimension_semantics = [#tpu.dimension_semantics<parallel>, #tpu.dimension_semantics<parallel>], iteration_bounds = array<i64: 2, 1>, scalar_prefetch = 0 : i64, scratch_operands = 0 : i64, tpu.core_type = #tpu.core_type<tc>, window_params = [{transform_indices = @transform_0, window_bounds = array<i64: 1, 16, 6>}, {pipeline_mode = #tpu.pipeline_mode<synchronous>, transform_indices = @transform_1, window_bounds = array<i64: 6, 128>}, {pipeline_mode = #tpu.pipeline_mode<synchronous>, transform_indices = @transform_2, window_bounds = array<i64: 3, 128>}, {pipeline_mode = #tpu.pipeline_mode<synchronous>, transform_indices = @transform_3, window_bounds = array<i64: 128, 8>}, {transform_indices = @transform_4, window_bounds = array<i64: 1, 16, 128>}]} {
    %c0 = arith.constant 0 : index
    %c0_0 = arith.constant 0 : index
    %c0_1 = arith.constant 0 : index
    %0 = vector.load %arg2[%c0, %c0_0, %c0_1] : memref<1x16x6xf32, #tpu.memory_space<vmem>>, vector<1x16x6xf32>
    %1 = vector.shape_cast %0 : vector<1x16x6xf32> to vector<16x6xf32>
    %c0_2 = arith.constant 0 : index
    %c0_3 = arith.constant 0 : index
    %2 = vector.load %arg3[%c0_2, %c0_3] : memref<6x128xf32, #tpu.memory_space<vmem>>, vector<6x128xf32>
    %c0_4 = arith.constant 0 : index
    %c0_5 = arith.constant 0 : index
    %3 = vector.load %arg4[%c0_4, %c0_5] : memref<3x128xf32, #tpu.memory_space<vmem>>, vector<1x128xf32>
    %c1 = arith.constant 1 : index
    %c0_6 = arith.constant 0 : index
    %4 = vector.load %arg4[%c1, %c0_6] : memref<3x128xf32, #tpu.memory_space<vmem>>, vector<1x128xf32>
    %c2 = arith.constant 2 : index
    %c0_7 = arith.constant 0 : index
    %5 = vector.load %arg4[%c2, %c0_7] : memref<3x128xf32, #tpu.memory_space<vmem>>, vector<1x128xf32>
    %cst = arith.constant dense<0.000000e+00> : vector<16x128xf32>
    %6 = tpu.matmul %1, %2, %cst {dimension_numbers = #tpu.dot_dimension_numbers<[1], [0], [0], [1], [0, 0, 1, 1], [], []>} : vector<16x6xf32>, vector<6x128xf32>, vector<16x128xf32> -> vector<16x128xf32>
    %7 = vector.broadcast %3 : vector<1x128xf32> to vector<16x128xf32>
    %8 = arith.addf %6, %7 : vector<16x128xf32>
    %9 = arith.mulf %8, %8 : vector<16x128xf32>
    %c0_8 = arith.constant 0 : index
    %c0_9 = arith.constant 0 : index
    %10 = vector.load %arg5[%c0_8, %c0_9] : memref<128x8xf32, #tpu.memory_space<vmem>>, vector<128x8xf32>
    %cst_10 = arith.constant dense<0.000000e+00> : vector<16x8xf32>
    %11 = tpu.matmul %9, %10, %cst_10 {dimension_numbers = #tpu.dot_dimension_numbers<[1], [0], [0], [1], [0, 0, 1, 1], [], []>} : vector<16x128xf32>, vector<128x8xf32>, vector<16x8xf32> -> vector<16x8xf32>
    %12 = vector.extract_strided_slice %11 {offsets = [0, 0], sizes = [16, 1], strides = [1, 1]} : vector<16x8xf32> to vector<16x1xf32>
    %cst_11 = arith.constant 0.00787401571 : f32
    %13 = vector.broadcast %cst_11 : f32 to vector<16x1xf32>
    %14 = arith.mulf %12, %13 : vector<16x1xf32>
    %cst_12 = arith.constant 9.99999997E-7 : f32
    %15 = vector.broadcast %cst_12 : f32 to vector<16x1xf32>
    %16 = arith.addf %14, %15 : vector<16x1xf32>
    %17 = math.sqrt %16 : vector<16x1xf32>
    %cst_13 = arith.constant 9.99999997E-7 : f32
    %18 = vector.broadcast %cst_13 : f32 to vector<16x1xf32>
    %19 = arith.addf %17, %18 : vector<16x1xf32>
    %20 = tpu.reciprocal %19 : vector<16x1xf32> -> vector<16x1xf32>
    %21 = vector.broadcast %20 : vector<16x1xf32> to vector<16x128xf32>
    %22 = arith.mulf %8, %21 : vector<16x128xf32>
    %23 = vector.broadcast %4 : vector<1x128xf32> to vector<16x128xf32>
    %24 = arith.mulf %23, %22 : vector<16x128xf32>
    %25 = vector.broadcast %5 : vector<1x128xf32> to vector<16x128xf32>
    %26 = arith.addf %24, %25 : vector<16x128xf32>
    %c0_14 = arith.constant 0 : index
    %c0_15 = arith.constant 0 : index
    %c0_16 = arith.constant 0 : index
    %27 = vector.load %arg6[%c0_14, %c0_15, %c0_16] : memref<1x16x128xf32, #tpu.memory_space<vmem>>, vector<1x16x128xf32>
    %28 = vector.shape_cast %27 : vector<1x16x128xf32> to vector<16x128xf32>
    %29 = vector.shape_cast %26 : vector<16x128xf32> to vector<1x16x128xf32>
    tpu.vector_store %arg6[%c0_14, %c0_15, %c0_16], %29 {strides = array<i32>} : memref<1x16x128xf32, #tpu.memory_space<vmem>>, vector<1x16x128xf32>,
    return
  }
  func.func @transform_0(%arg0: i32, %arg1: i32) -> (i32, i32, i32) {
    %c0_i32 = arith.constant 0 : i32
    %c0_i32_0 = arith.constant 0 : i32
    return %arg0, %arg1, %c0_i32 : i32, i32, i32
  }
  func.func @transform_1(%arg0: i32, %arg1: i32) -> (i32, i32) {
    %c0_i32 = arith.constant 0 : i32
    %c0_i32_0 = arith.constant 0 : i32
    %c0_i32_1 = arith.constant 0 : i32
    return %c0_i32, %c0_i32_0 : i32, i32
  }
  func.func @transform_2(%arg0: i32, %arg1: i32) -> (i32, i32) {
    %c0_i32 = arith.constant 0 : i32
    %c0_i32_0 = arith.constant 0 : i32
    %c0_i32_1 = arith.constant 0 : i32
    return %c0_i32, %c0_i32_0 : i32, i32
  }
  func.func @transform_3(%arg0: i32, %arg1: i32) -> (i32, i32) {
    %c0_i32 = arith.constant 0 : i32
    %c0_i32_0 = arith.constant 0 : i32
    %c0_i32_1 = arith.constant 0 : i32
    return %c0_i32, %c0_i32_0 : i32, i32
  }
  func.func @transform_4(%arg0: i32, %arg1: i32) -> (i32, i32, i32) {
    %c0_i32 = arith.constant 0 : i32
    %c0_i32_0 = arith.constant 0 : i32
    return %arg0, %arg1, %c0_i32 : i32, i32, i32
  }
}

</mosaic_0001>

<llo_original>
// kernel: tpu_custom_call.1
$region0: #{tpu_custom_call.1}
  #allocation0 [shape = 'u32[]', space=smem, size = 0x4, offset = 0x4, fixed_abs, tag = 'smem constant byte address 0x4 - core index']
  #allocation1 [shape = 'u32[144,128]{1,0:T(1,128)}', space=vmem, size = 0x12000, scoped, tag = 'internal scratch']
  %s0 = inlined_call_operand.vmem [shape: f32[2,16,6], index: 0, kind: input, shape index: {}]
  %s1 = inlined_call_operand.vmem [shape: f32[6,128], index: 1, kind: input, shape index: {}]
  %s2 = inlined_call_operand.vmem [shape: f32[3,128], index: 2, kind: input, shape index: {}]
  %s3 = inlined_call_operand.vmem [shape: f32[128,8], index: 3, kind: input, shape index: {}]
  %s4 = inlined_call_operand.hbm [shape: f32[2,16,128], index: 4, kind: output, shape index: {}]
  %s5 = sld [smem:[#allocation0]]
  $region49: #{tpu_custom_call.1} parent=0
    _
  %s7 = ssub.s32 1, %s5
  %s8 = scalar_select 0, %s7, %s5
  $region1: #{tpu_custom_call.1} parent=0
    #allocation2 [shape = 'u8[16384]{0}', space=vmem, size = 0x4000, scoped, tag = 'output window, operand 0']
    #allocation3 [shape = 's32[2]{0}', space=sflag, size = 0x8, scoped, tag = 'scoped memory for tpu_custom_call.1']
    %9 = vsyncpa [#allocation3], 0
    %s10 = scalar_lea.sflag [#allocation3], 1
    %11 = vsyncpa %s10, 0
    loop: start=0, step=1, limit=4
    $region2: #{tpu_custom_call.1} parent=1 // loop_pre_header
      _
    $region3: #{tpu_custom_call.1} parent=1 // loop_header
      %s13 = sphi 0, %s17
      %p14 = scmp.ge.s32.totalorder %s13, 4
      %s20 = sphi 0, %s32
      %s21 = sphi 0, %s28
      %s22 = sphi 0, %s20
      %s23 = sphi 0, %s21
      %s24 = sphi 0, %s22
      %s25 = sphi 0, %s23
      %s37 = sphi 0, %s39
      %s40 = sphi 0, %s37
      %s41 = sphi 0, %s40
      %s57 = sphi 0, %s41
      %s61 = sphi 0, %s61
      %s63 = sphi 0, %s61
      %s64 = sphi 0, %s63
      %s78 = sphi 0, %s64
      %s82 = sphi 0, %s82
      %s84 = sphi 0, %s82
      %s85 = sphi 0, %s84
      %s99 = sphi 0, %s85
      %s103 = sphi 0, %s103
      %s105 = sphi 0, %s103
      %s106 = sphi 0, %s105
      %s120 = sphi 0, %s106
      %s128 = sphi 0, %s130
      %s131 = sphi 0, %s128
      %s132 = sphi 0, %s131
      %s148 = sphi 0, %s132
    $region4: #{tpu_custom_call.1} parent=1 // loop_header_branch
      %16 = sbr.rel (%p14) target = $region8
    $region5: #{tpu_custom_call.1} parent=1 // loop_body
      %s18 = ssub.s32 %s13, 1
      %s19 = ssub.s32 %s13, 2
      %s26 = sadd.s32 1, %s21
      %p27 = scmp.ge.s32.totalorder %s26, 1
      %s28 = scalar_select %p27, 0, %s26
      %s29 = sadd.s32 1, %s20
      %s30 = scalar_select %p27, %s29, %s20
      %p31 = scmp.ge.s32.totalorder %s30, 2
      %s32 = scalar_select %p31, 0, %s30
      %s33 = ssub.s32 %s20, %s32
      %s34 = ssub.s32 %s21, %s28
      %s35 = sor.u32 %s33, %s34
      %p36 = scmp.eq.s32.totalorder %s35, 0
      %s38 = sadd.s32 %s37, 1
      %s39 = scalar_select %p36, %s37, %s38
      %p42 = pneg %p36
      %p43 = scmp.eq.s32.totalorder %s13, 1
      %p44 = por %p42, %p43
      %p45 = scmp.ne.s32.totalorder %s37, %s40
      %p46 = scmp.eq.s32.totalorder %s13, 0
      %p47 = por %p45, %p46
      %p48 = scmp.ne.s32.totalorder %s37, %s40
      %p49 = scmp.eq.s32.totalorder %s18, 1
      %p50 = por %p48, %p49
      %p51 = scmp.ne.s32.totalorder %s40, %s41
      %p52 = scmp.eq.s32.totalorder %s18, 0
      %p53 = por %p51, %p52
      %p54 = scmp.ne.s32.totalorder %s40, %s41
      %p55 = scmp.eq.s32.totalorder %s19, 1
      %p56 = por %p54, %p55
      %p58 = scmp.ne.s32.totalorder %s41, %s57
      %p59 = scmp.eq.s32.totalorder %s19, 0
      %p60 = por %p58, %p59
      %s62 = sadd.s32 %s61, 1
      %p65 = scmp.eq.s32.totalorder %s13, 1
      %p66 = scmp.ne.s32.totalorder %s61, %s63
      %p67 = scmp.eq.s32.totalorder %s13, 0
      %p68 = por %p66, %p67
      %p69 = scmp.ne.s32.totalorder %s61, %s63
      %p70 = scmp.eq.s32.totalorder %s18, 1
      %p71 = por %p69, %p70
      %p72 = scmp.ne.s32.totalorder %s63, %s64
      %p73 = scmp.eq.s32.totalorder %s18, 0
      %p74 = por %p72, %p73
      %p75 = scmp.ne.s32.totalorder %s63, %s64
      %p76 = scmp.eq.s32.totalorder %s19, 1
      %p77 = por %p75, %p76
      %p79 = scmp.ne.s32.totalorder %s64, %s78
      %p80 = scmp.eq.s32.totalorder %s19, 0
      %p81 = por %p79, %p80
      %s83 = sadd.s32 %s82, 1
      %p86 = scmp.eq.s32.totalorder %s13, 1
      %p87 = scmp.ne.s32.totalorder %s82, %s84
      %p88 = scmp.eq.s32.totalorder %s13, 0
      %p89 = por %p87, %p88
      %p90 = scmp.ne.s32.totalorder %s82, %s84
      %p91 = scmp.eq.s32.totalorder %s18, 1
      %p92 = por %p90, %p91
      %p93 = scmp.ne.s32.totalorder %s84, %s85
      %p94 = scmp.eq.s32.totalorder %s18, 0
      %p95 = por %p93, %p94
      %p96 = scmp.ne.s32.totalorder %s84, %s85
      %p97 = scmp.eq.s32.totalorder %s19, 1
      %p98 = por %p96, %p97
      %p100 = scmp.ne.s32.totalorder %s85, %s99
      %p101 = scmp.eq.s32.totalorder %s19, 0
      %p102 = por %p100, %p101
      %s104 = sadd.s32 %s103, 1
      %p107 = scmp.eq.s32.totalorder %s13, 1
      %p108 = scmp.ne.s32.totalorder %s103, %s105
      %p109 = scmp.eq.s32.totalorder %s13, 0
      %p110 = por %p108, %p109
      %p111 = scmp.ne.s32.totalorder %s103, %s105
      %p112 = scmp.eq.s32.totalorder %s18, 1
      %p113 = por %p111, %p112
      %p114 = scmp.ne.s32.totalorder %s105, %s106
      %p115 = scmp.eq.s32.totalorder %s18, 0
      %p116 = por %p114, %p115
      %p117 = scmp.ne.s32.totalorder %s105, %s106
      %p118 = scmp.eq.s32.totalorder %s19, 1
      %p119 = por %p117, %p118
      %p121 = scmp.ne.s32.totalorder %s106, %s120
      %p122 = scmp.eq.s32.totalorder %s19, 0
      %p123 = por %p121, %p122
      %s124 = ssub.s32 %s20, %s32
      %s125 = ssub.s32 %s21, %s28
      %s126 = sor.u32 %s124, %s125
      %p127 = scmp.eq.s32.totalorder %s126, 0
      %s129 = sadd.s32 %s128, 1
      %s130 = scalar_select %p127, %s128, %s129
      %p133 = pneg %p127
      %p134 = scmp.eq.s32.totalorder %s13, 1
      %p135 = por %p133, %p134
      %p136 = scmp.ne.s32.totalorder %s128, %s131
      %p137 = scmp.eq.s32.totalorder %s13, 0
      %p138 = por %p136, %p137
      %p139 = scmp.ne.s32.totalorder %s128, %s131
      %p140 = scmp.eq.s32.totalorder %s18, 1
      %p141 = por %p139, %p140
      %p142 = scmp.ne.s32.totalorder %s131, %s132
      %p143 = scmp.eq.s32.totalorder %s18, 0
      %p144 = por %p142, %p143
      %p145 = scmp.ne.s32.totalorder %s131, %s132
      %p146 = scmp.eq.s32.totalorder %s19, 1
      %p147 = por %p145, %p146
      %p149 = scmp.ne.s32.totalorder %s132, %s148
      %p150 = scmp.eq.s32.totalorder %s19, 0
      %p151 = por %p149, %p150
      %p152 = scmp.le.s32.totalorder 1, %s13
      %p153 = scmp.lt.s32.totalorder %s13, 3
      %p154 = pnand %p152, %p153
      %p155 = pneg %p154
      // Predicated region
      $region9: #{tpu_custom_call.1} parent=5 // pred_check
        _
      $region10: #{tpu_custom_call.1} parent=5 // pred_check_branch
        %157 = sbr.rel (%p154) target = $region12
      $region11: #{tpu_custom_call.1} parent=5 // pred_region
        %s158 = ssub.s32 %s13, 1
        // Predicated region
        $region13: #{tpu_custom_call.1} parent=11 // pred_check
          %p159 = pneg %p74
        $region14: #{tpu_custom_call.1} parent=11 // pred_check_branch
          %161 = sbr.rel (%p159) target = $region16
        $region15: #{tpu_custom_call.1} parent=11 // pred_region
          _
        $region16: #{tpu_custom_call.1} parent=11 // pred_fallthru
          _
        // Predicated region
        $region17: #{tpu_custom_call.1} parent=11 // pred_check
          %p162 = pneg %p95
        $region18: #{tpu_custom_call.1} parent=11 // pred_check_branch
          %164 = sbr.rel (%p162) target = $region20
        $region19: #{tpu_custom_call.1} parent=11 // pred_region
          _
        $region20: #{tpu_custom_call.1} parent=11 // pred_fallthru
          _
        // Predicated region
        $region21: #{tpu_custom_call.1} parent=11 // pred_check
          %p165 = pneg %p116
        $region22: #{tpu_custom_call.1} parent=11 // pred_check_branch
          %167 = sbr.rel (%p165) target = $region24
        $region23: #{tpu_custom_call.1} parent=11 // pred_region
          _
        $region24: #{tpu_custom_call.1} parent=11 // pred_fallthru
          _
      $region12: #{tpu_custom_call.1} parent=5 // pred_fallthru
        _
      %p168 = scmp.lt.s32.totalorder %s13, 2
      // Predicated region
      $region25: #{tpu_custom_call.1} parent=5 // pred_check
        %p169 = pneg %p168
      $region26: #{tpu_custom_call.1} parent=5 // pred_check_branch
        %171 = sbr.rel (%p169) target = $region28
      $region27: #{tpu_custom_call.1} parent=5 // pred_region
        // Predicated region
        $region29: #{tpu_custom_call.1} parent=27 // pred_check
          %p172 = pneg %p47
        $region30: #{tpu_custom_call.1} parent=27 // pred_check_branch
          %174 = sbr.rel (%p172) target = $region32
        $region31: #{tpu_custom_call.1} parent=27 // pred_region
          %s175 = smul.u32 2, %s21
          %p176 = scmp.lt.s32.totalorder %s20, 1
          %s177 = scalar_select %p176, %s20, 1
          %p178 = scmp.lt.s32.totalorder %s175, 1
          %s179 = scalar_select %p178, %s175, 1
          %s180 = smul.addr %s177, 2
          %s181 = sadd.s32 %s179, %s180
          %s182 = smul.addr %s181, 8
          %s183 = scalar_lea.vmem %s0, %s182
          %s184 = smul.u32 2, %s21
        $region32: #{tpu_custom_call.1} parent=27 // pred_fallthru
          _
      $region28: #{tpu_custom_call.1} parent=5 // pred_fallthru
        _
      %p185 = scmp.le.s32.totalorder 1, %s13
      %p186 = scmp.lt.s32.totalorder %s13, 3
      %p187 = pnand %p185, %p186
      %p188 = pneg %p187
      // Predicated region
      $region33: #{tpu_custom_call.1} parent=5 // pred_check
        _
      $region34: #{tpu_custom_call.1} parent=5 // pred_check_branch
        %190 = sbr.rel (%p187) target = $region36
      $region35: #{tpu_custom_call.1} parent=5 // pred_region
        %s191 = ssub.s32 %s13, 1
        %s192 = smul.u32 2, %s23
        %p193 = scmp.lt.s32.totalorder %s22, 1
        %s194 = scalar_select %p193, %s22, 1
        %p195 = scmp.lt.s32.totalorder %s192, 1
        %s196 = scalar_select %p195, %s192, 1
        %s197 = smul.addr %s194, 2
        %s198 = sadd.s32 %s196, %s197
        %s199 = smul.addr %s198, 8
        %s200 = scalar_lea.vmem %s0, %s199
        %p201 = pneg %p53
        %p202 = pneg %p50
        %p203 = pneg %p74
        %p204 = pneg %p71
        %p205 = pneg %p95
        %p206 = pneg %p92
        %p207 = pneg %p116
        %p208 = pneg %p113
        %p209 = pneg %p144
        %p210 = pneg %p141
        %s211 = sand.u32 %s131, 1
        %s212 = scalar_lea.sflag [#allocation3], %s211
        %s213 = sand.u32 %s131, 1
        %s214 = smul.addr %s213, 16
        %s215 = scalar_lea.vmem [#allocation2], %s214
        %s216 = smul.u32 2, %s23
        %p217 = scmp.lt.s32.totalorder %s22, 1
        %s218 = scalar_select %p217, %s22, 1
        %p219 = scmp.lt.s32.totalorder %s216, 1
        %s220 = scalar_select %p219, %s216, 1
        %s221 = smul.addr %s218, 2
        %s222 = sadd.s32 %s220, %s221
        %s223 = smul.addr %s222, 8
        %s224 = scalar_lea.vmem %s0, %s223
        %s225 = smul.u32 2, %s23
        %s226 = smul.u32 2, %s23
        %v227 = vld [vmem:[%s224] sm:$0xff]
        %v228 = vld [vmem:[%s224 + $0x8] sm:$0xff]
        %v229 = vld [vmem:[%s1] sm:$0x3f]
        %v230 = vld [vmem:[%s2] sm:$0x1]
        %v231 = vld [vmem:[%s2 + $0x1] sm:$0x1]
        %v232 = vld [vmem:[%s2 + $0x2] sm:$0x1]
        %v233 = vlaneseq
        %v234 = vshrl.u32 %v233, 7
        %v235 = vsub.s32 0, %v234
        %v236 = vrot.slane %v230, %v235
        %vm237 = vcmask 48128
        %v239 = vsel %vm237, %v227, 0
        %v242 = vsel %vm237, %v228, 0
        %vm244 = vcmask 1045504
        %v246 = vsel %vm244, %v229, 0
        %248 = vmatprep.subr.mxu0 0.0
        %249 = vmatpush1.msra.mxu0 %v246
        %250 = vmatprep.subr.mxu0 0.0
        %251 = vmatpush1.msra.mxu0 0.0
        %252 = vmatprep.subr.mxu0 0.0
        %253 = vmatpush1.msra.mxu0 0.0
        %254 = vmatprep.subr.mxu0 0.0
        %255 = vmatpush1.msra.mxu0 0.0
        %256 = vmatprep.subr.mxu0 0.0
        %257 = vmatpush1.msra.mxu0 0.0
        %258 = vmatprep.subr.mxu0 0.0
        %259 = vmatpush1.msra.mxu0 0.0
        %260 = vmatprep.subr.mxu0 0.0
        %261 = vmatpush1.msra.mxu0 0.0
        %262 = vmatprep.subr.mxu0 0.0
        %263 = vmatpush1.msra.mxu0 0.0
        %264 = vmatprep.subr.mxu0 0.0
        %265 = vmatpush1.msra.mxu0 0.0
        %266 = vmatprep.subr.mxu0 0.0
        %267 = vmatpush1.msra.mxu0 0.0
        %268 = vmatprep.subr.mxu0 0.0
        %269 = vmatpush1.msra.mxu0 0.0
        %270 = vmatprep.subr.mxu0 0.0
        %271 = vmatpush1.msra.mxu0 0.0
        %272 = vmatprep.subr.mxu0 0.0
        %273 = vmatpush1.msra.mxu0 0.0
        %274 = vmatprep.subr.mxu0 0.0
        %275 = vmatpush1.msra.mxu0 0.0
        %276 = vmatprep.subr.mxu0 0.0
        %277 = vmatpush1.msra.mxu0 0.0
        %278 = vmatprep.subr.mxu0 0.0
        %279 = vmatpush1.msra.mxu0 0.0
        %280 = vmatprep.subr.mxu0 0.0
        %281 = vmatpush1.msra.mxu0 0.0
        %282 = vmatprep.subr.mxu0 0.0
        %283 = vmatpush1.msra.mxu0 0.0
        %284 = vmatprep.subr.mxu0 0.0
        %285 = vmatpush1.msra.mxu0 0.0
        %286 = vmatprep.subr.mxu0 0.0
        %287 = vmatpush1.msra.mxu0 0.0
        %288 = vmatprep.subr.mxu0 0.0
        %289 = vmatpush1.msra.mxu0 0.0
        %290 = vmatprep.subr.mxu0 0.0
        %291 = vmatpush1.msra.mxu0 0.0
        %292 = vmatprep.subr.mxu0 0.0
        %293 = vmatpush1.msra.mxu0 0.0
        %294 = vmatprep.subr.mxu0 0.0
        %295 = vmatpush1.msra.mxu0 0.0
        %296 = vmatprep.subr.mxu0 0.0
        %297 = vmatpush1.msra.mxu0 0.0
        %298 = vmatprep.subr.mxu0 0.0
        %299 = vmatpush1.msra.mxu0 0.0
        %300 = vmatprep.subr.mxu0 0.0
        %301 = vmatpush1.msra.mxu0 0.0
        %302 = vmatprep.subr.mxu0 0.0
        %303 = vmatpush1.msra.mxu0 0.0
        %304 = vmatprep.subr.mxu0 0.0
        %305 = vmatpush1.msra.mxu0 0.0
        %306 = vmatprep.subr.mxu0 0.0
        %307 = vmatpush1.msra.mxu0 0.0
        %308 = vmatprep.subr.mxu0 0.0
        %309 = vmatpush1.msra.mxu0 0.0
        %310 = vmatprep.subr.mxu0 0.0
        %311 = vmatpush1.msra.mxu0 0.0
        %312 = vmatprep.mubr.f32.mxu0 0.0
        %313 = vmatmul.mubr.f32.gmra.mrb[0].mxu0 %v239
        %v314 = vpop.f32.mrb[0].mxu0
        %v315 = vadd.f32 %v236, %v314
        %v316 = vpop.f32.mrb[0].mxu0
        %317 = vmatprep.mubr.f32.mxu0 0.0
        %318 = vmatmul.mubr.f32.gmra.mrb[0].mxu0 %v242
        %v319 = vpop.f32.mrb[0].mxu0
        %v320 = vadd.f32 %v236, %v319
        %v321 = vpop.f32.mrb[0].mxu0
        %322 = vdwg.mxu0
        %v323 = vmul.f32 %v315, %v315
        %v324 = vmul.f32 %v320, %v320
        %v325 = vld [vmem:[%s3] sm:$0xff]
        %v326 = vld [vmem:[%s3 + $0x8] sm:$0xff]
        %v327 = vld [vmem:[%s3 + $0x10] sm:$0xff]
        %v328 = vld [vmem:[%s3 + $0x18] sm:$0xff]
        %v329 = vld [vmem:[%s3 + $0x20] sm:$0xff]
        %v330 = vld [vmem:[%s3 + $0x28] sm:$0xff]
        %v331 = vld [vmem:[%s3 + $0x30] sm:$0xff]
        %v332 = vld [vmem:[%s3 + $0x38] sm:$0xff]
        %v333 = vld [vmem:[%s3 + $0x40] sm:$0xff]
        %v334 = vld [vmem:[%s3 + $0x48] sm:$0xff]
        %v335 = vld [vmem:[%s3 + $0x50] sm:$0xff]
        %v336 = vld [vmem:[%s3 + $0x58] sm:$0xff]
        %v337 = vld [vmem:[%s3 + $0x60] sm:$0xff]
        %v338 = vld [vmem:[%s3 + $0x68] sm:$0xff]
        %v339 = vld [vmem:[%s3 + $0x70] sm:$0xff]
        %v340 = vld [vmem:[%s3 + $0x78] sm:$0xff]
        %341 = vmatprep.subr.mxu0 0.0
        %342 = vmatpush1.msra.mxu0 %v325
        %343 = vmatprep.subr.mxu0 0.0
        %344 = vmatpush1.msra.mxu0 %v326
        %345 = vmatprep.subr.mxu0 0.0
        %346 = vmatpush1.msra.mxu0 %v327
        %347 = vmatprep.subr.mxu0 0.0
        %348 = vmatpush1.msra.mxu0 %v328
        %349 = vmatprep.subr.mxu0 0.0
        %350 = vmatpush1.msra.mxu0 %v329
        %351 = vmatprep.subr.mxu0 0.0
        %352 = vmatpush1.msra.mxu0 %v330
        %353 = vmatprep.subr.mxu0 0.0
        %354 = vmatpush1.msra.mxu0 %v331
        %355 = vmatprep.subr.mxu0 0.0
        %356 = vmatpush1.msra.mxu0 %v332
        %357 = vmatprep.subr.mxu0 0.0
        %358 = vmatpush1.msra.mxu0 %v333
        %359 = vmatprep.subr.mxu0 0.0
        %360 = vmatpush1.msra.mxu0 %v334
        %361 = vmatprep.subr.mxu0 0.0
        %362 = vmatpush1.msra.mxu0 %v335
        %363 = vmatprep.subr.mxu0 0.0
        %364 = vmatpush1.msra.mxu0 %v336
        %365 = vmatprep.subr.mxu0 0.0
        %366 = vmatpush1.msra.mxu0 %v337
        %367 = vmatprep.subr.mxu0 0.0
        %368 = vmatpush1.msra.mxu0 %v338
        %369 = vmatprep.subr.mxu0 0.0
        %370 = vmatpush1.msra.mxu0 %v339
        %371 = vmatprep.subr.mxu0 0.0
        %372 = vmatpush1.msra.mxu0 %v340
        %373 = vmatprep.subr.mxu0 0.0
        %374 = vmatpush1.msra.mxu0 0.0
        %375 = vmatprep.subr.mxu0 0.0
        %376 = vmatpush1.msra.mxu0 0.0
        %377 = vmatprep.subr.mxu0 0.0
        %378 = vmatpush1.msra.mxu0 0.0
        %379 = vmatprep.subr.mxu0 0.0
        %380 = vmatpush1.msra.mxu0 0.0
        %381 = vmatprep.subr.mxu0 0.0
        %382 = vmatpush1.msra.mxu0 0.0
        %383 = vmatprep.subr.mxu0 0.0
        %384 = vmatpush1.msra.mxu0 0.0
        %385 = vmatprep.subr.mxu0 0.0
        %386 = vmatpush1.msra.mxu0 0.0
        %387 = vmatprep.subr.mxu0 0.0
        %388 = vmatpush1.msra.mxu0 0.0
        %389 = vmatprep.subr.mxu0 0.0
        %390 = vmatpush1.msra.mxu0 0.0
        %391 = vmatprep.subr.mxu0 0.0
        %392 = vmatpush1.msra.mxu0 0.0
        %393 = vmatprep.subr.mxu0 0.0
        %394 = vmatpush1.msra.mxu0 0.0
        %395 = vmatprep.subr.mxu0 0.0
        %396 = vmatpush1.msra.mxu0 0.0
        %397 = vmatprep.subr.mxu0 0.0
        %398 = vmatpush1.msra.mxu0 0.0
        %399 = vmatprep.subr.mxu0 0.0
        %400 = vmatpush1.msra.mxu0 0.0
        %401 = vmatprep.subr.mxu0 0.0
        %402 = vmatpush1.msra.mxu0 0.0
        %403 = vmatprep.subr.mxu0 0.0
        %404 = vmatpush1.msra.mxu0 0.0
        %405 = vmatprep.mubr.f32.mxu0 0.0
        %406 = vmatmul.mubr.f32.gmra.mrb[0].mxu0 %v323
        %v407 = vpop.f32.mrb[0].mxu0
        %v408 = vadd.f32 0.0, %v407
        %v409 = vpop.f32.mrb[0].mxu0
        %410 = vmatprep.mubr.f32.mxu0 0.0
        %411 = vmatmul.mubr.f32.gmra.mrb[0].mxu0 %v324
        %v412 = vpop.f32.mrb[0].mxu0
        %v413 = vadd.f32 0.0, %v412
        %v414 = vpop.f32.mrb[0].mxu0
        %415 = vdwg.mxu0
        %v416 = vmul.f32 %v408, 0.007874016
        %v417 = vmul.f32 %v413, 0.007874016
        %v418 = vadd.f32 %v416, 1e-06
        %v419 = vadd.f32 %v417, 1e-06
        %v420 = vrsqrt.pop %v418
        %v421 = vmul.f32 %v418, %v420
        %vm422 = vcmp.eq.f32.partialorder %v418, inf
        %v423 = vsel %vm422, %v418, %v421
        %vm424 = vcmp.eq.f32.partialorder %v418, 0.0
        %v425 = vand.u32 %v418, 2147483648
        %v426 = vsel %vm424, %v425, %v423
        %v427 = vrsqrt.pop %v419
        %v428 = vmul.f32 %v419, %v427
        %vm429 = vcmp.eq.f32.partialorder %v419, inf
        %v430 = vsel %vm429, %v419, %v428
        %vm431 = vcmp.eq.f32.partialorder %v419, 0.0
        %v432 = vand.u32 %v419, 2147483648
        %v433 = vsel %vm431, %v432, %v430
        %v434 = vadd.f32 %v426, 1e-06
        %v435 = vadd.f32 %v433, 1e-06
        %v436 = vrcp.pop %v434
        %v437 = vrcp.pop %v435
        %439 = vset.pattern.permute.xlu0 0
        %440 = vperm.xlu0 %439, %v436
        %v441 = vpop.permute.xlu0 %440
        %444 = vset.pattern.permute.xlu0 0
        %445 = vperm.xlu0 %444, %v437
        %v446 = vpop.permute.xlu0 %445
        %v448 = vmul.f32 %v315, %v441
        %v449 = vmul.f32 %v320, %v446
        %v450 = vlaneseq
        %v451 = vshrl.u32 %v450, 7
        %v452 = vsub.s32 0, %v451
        %v453 = vrot.slane %v231, %v452
        %v454 = vmul.f32 %v453, %v448
        %v455 = vmul.f32 %v453, %v449
        %v456 = vlaneseq
        %v457 = vshrl.u32 %v456, 7
        %v458 = vsub.s32 0, %v457
        %v459 = vrot.slane %v232, %v458
        %v460 = vadd.f32 %v454, %v459
        %v461 = vadd.f32 %v455, %v459
        %462 = vst [vmem:[%s215] sm:$0xff] %v460
        %463 = vst [vmem:[%s215 + $0x8] sm:$0xff] %v461
        %s464 = sand.u32 %s131, 1
        %s465 = scalar_lea.sflag [#allocation3], %s464
        %s466 = sand.u32 %s131, 1
        %s467 = smul.addr %s466, 16
        %s468 = scalar_lea.vmem [#allocation2], %s467
        // Predicated region
        $region37: #{tpu_custom_call.1} parent=35 // pred_check
          %p469 = pneg %p141
        $region38: #{tpu_custom_call.1} parent=35 // pred_check_branch
          %471 = sbr.rel (%p469) target = $region40
        $region39: #{tpu_custom_call.1} parent=35 // pred_region
          %s472 = smul.u32 2, %s23
          %s474 = ssub.s32 256, 256
          %475 = vsyncadd %s465, %s474
          %s476 = smul.addr %s22, 2
          %s477 = sadd.s32 %s472, %s476
          %s478 = smul.addr %s477, 128
          %s479 = scalar_lea.hbm %s4, %s478
          %s480 = sshll.u32 %s468, 4
          %s481 = int_to_ptr.vmem [resolvable:$true] %s480
          %486 = dma.vmem_to_hbm [thread:$0]  %s481, 256, %s479, %s465, 128, 128, 8
        $region40: #{tpu_custom_call.1} parent=35 // pred_fallthru
          _
      $region36: #{tpu_custom_call.1} parent=5 // pred_fallthru
        _
      %p487 = scmp.le.s32.totalorder 2, %s13
      // Predicated region
      $region41: #{tpu_custom_call.1} parent=5 // pred_check
        %p488 = pneg %p487
      $region42: #{tpu_custom_call.1} parent=5 // pred_check_branch
        %490 = sbr.rel (%p488) target = $region44
      $region43: #{tpu_custom_call.1} parent=5 // pred_region
        %s491 = ssub.s32 %s13, 2
        // Predicated region
        $region45: #{tpu_custom_call.1} parent=43 // pred_check
          %p492 = pneg %p147
        $region46: #{tpu_custom_call.1} parent=43 // pred_check_branch
          %494 = sbr.rel (%p492) target = $region48
        $region47: #{tpu_custom_call.1} parent=43 // pred_region
          %s495 = sand.u32 %s132, 1
          %s496 = scalar_lea.sflag [#allocation3], %s495
          %s497 = sand.u32 %s132, 1
          %s498 = smul.addr %s497, 16
          %s499 = scalar_lea.vmem [#allocation2], %s498
          %500 = dma.done %s496, 256
        $region48: #{tpu_custom_call.1} parent=43 // pred_fallthru
          _
      $region44: #{tpu_custom_call.1} parent=5 // pred_fallthru
        _
    $region6: #{tpu_custom_call.1} parent=1 // loop_footer
      %s17 = sadd.s32 1, %s13
    $region7: #{tpu_custom_call.1} parent=1 // loop_footer_branch
      %12 = sbr.rel target = $region3
    $region8: #{tpu_custom_call.1} parent=1 // loop_exit
      _
    %501 = vsyncpa [#allocation3], 1
    %s502 = scalar_lea.sflag [#allocation3], 1
    %503 = vsyncpa %s502, 1

</llo_original>
